<compile_context>
chip_gen: v7x
topology: tpu7x:2x2x1
jax: 0.10.0
libtpu: 0.0.40
codegen_flags: <defaults>
</compile_context>

<pallas_src>
import functools

import jax
import jax.numpy as jnp
from jax.experimental import pallas as pl
from jax.experimental.pallas import tpu as pltpu


def _ls_ce_kernel(preds_ref, target_ref, out_ref, acc_ref, *,
                  epsilon: float, n_rows: int):
    # preds_ref:  (TB, C) input-dtype tile in VMEM
    # target_ref: (TB, 1) int32 tile in VMEM
    # out_ref:    (1, 1)  f32 per-split partial sum
    # acc_ref:    (1, 1)  f32 VMEM scratch accumulator (per core)
    i = pl.program_id(1)            # inner ("arbitrary") reduction axis

    @pl.when(i == 0)
    def _init():
        acc_ref[...] = jnp.zeros_like(acc_ref)

    x = preds_ref[...]              # native dtype; no upfront f32 copy
    tb, c = x.shape
    use_mxu = (x.dtype == jnp.bfloat16)

    # Row max in the native dtype (exact for bf16; halves VPU work vs f32).
    m = jnp.max(x, axis=-1, keepdims=True)                          # (TB, 1)
    m32 = m.astype(jnp.float32)

    # logsumexp: only (x - m) is promoted to f32 for the exp/log path.
    xm = x.astype(jnp.float32) - m32                                # (TB, C) f32
    s = jnp.sum(jnp.exp(xm), axis=-1, keepdims=True)                # (TB, 1) f32
    lse = m32 + jnp.log(s)                                          # logsumexp

    # x[row, target[row]] via a one-hot select in the native dtype.
    tgt = target_ref[...]                                           # (TB, 1)
    col = jax.lax.broadcasted_iota(jnp.int32, (tb, c), 1)           # (TB, C)
    zero = jnp.zeros((), x.dtype)
    masked = jnp.where(col == tgt, x, zero)                         # (TB, C)

    if use_mxu:
        # Offload lane reductions to the otherwise-idle MXU (f32 accumulation).
        ones = jnp.ones((c, 1), dtype=x.dtype)
        sx = jnp.dot(x, ones, preferred_element_type=jnp.float32)       # (TB,1)
        xt = jnp.dot(masked, ones, preferred_element_type=jnp.float32)  # (TB,1)
    else:
        sx = jnp.sum(x.astype(jnp.float32), axis=-1, keepdims=True)
        xt = jnp.sum(masked.astype(jnp.float32), axis=-1, keepdims=True)

    row_neg_sum = c * lse - sx      # -sum(log_softmax(x))     per row
    nll_row = lse - xt              # -log_softmax(x)[target]  per row
    contrib = (epsilon / c) * row_neg_sum + (1.0 - epsilon) * nll_row

    # Mask rows past the true batch size (partial last tile reads padding).
    tile = pl.program_id(0) * pl.num_programs(1) + i
    rows = tile * tb + jax.lax.broadcasted_iota(jnp.int32, (tb, 1), 0)
    contrib = jnp.where(rows < n_rows, contrib, 0.0)

    acc_ref[...] = acc_ref[...] + jnp.sum(contrib)

    @pl.when(i == pl.num_programs(1) - 1)
    def _finalize():
        out_ref[...] = acc_ref[...]     # partial sum; mean taken in the wrapper


def _vmem_capacity_bytes():
    try:
        return int(pltpu.get_tpu_info().vmem_capacity_bytes)
    except Exception:
        return 64 * 2**20               # v7x per-core VMEM (smallest of v5e/v6e/v7x)


def label_smoothing_cross_entropy(preds, target, epsilon: float = 0.1,
                                  block_rows=None, num_splits=None):
    """preds: (N, C) float (any dtype); target: (N,) int.  Returns scalar f32."""
    n, c = preds.shape
    itemsize = jnp.dtype(preds.dtype).itemsize
    # Min sublane multiple for the input dtype: 8 (f32), 16 (bf16), 32 (int8).
    sub = max(8, 32 // itemsize)

    # ---- VMEM accounting (per-row bytes, all buffers & temporaries counted) --
    per_row = (2 * c * itemsize        # preds input block, double-buffered
               + 2 * c * 4             # f32 temporaries: (x - m) and exp(x - m)
               + c * itemsize          # native-dtype one-hot select temp
               + c * 4                 # column iota (int32)
               + 2 * 128 * 4)          # (tb,1) int32 target, lane-padded, x2 bufs

    vmem_cap = _vmem_capacity_bytes()
    budget = min(int(vmem_cap * 0.55), 48 * 2**20)   # leave compiler headroom

    if block_rows is None:
        block_rows = max(sub, budget // per_row)
    # Target ~<= 8 MiB of *input dtype* per preds block (HBM-roofline sweet spot).
    max_rows_8mib = max(sub, (8 * 2**20) // max(1, c * itemsize))
    tb = min(int(block_rows), max_rows_8mib)
    tb = max(sub, (tb // sub) * sub)
    n_pad = ((n + sub - 1) // sub) * sub
    tb = min(tb, n_pad)

    num_tiles = -(-n // tb)

    # ---- Two-TensorCore split (v7x); sequential & harmless on 1-TC chips. ----
    splits = 2 if num_splits is None else max(1, int(num_splits))
    if num_tiles < 2:
        splits = 1
    if splits > 1 and num_tiles % splits != 0:
        # Shrink the tile slightly so the tile count divides evenly (keeps the
        # grid rectangular with no fully out-of-bounds blocks).
        want = ((num_tiles + splits - 1) // splits) * splits
        tb_try = -(-n // want)
        tb_try = max(sub, ((tb_try + sub - 1) // sub) * sub)
        if (-(-n // tb_try)) % splits == 0:
            tb = tb_try
            num_tiles = -(-n // tb)
        else:
            splits = 1
    tiles_per_split = num_tiles // splits

    vmem_limit = int(max(16 * 2**20, min(vmem_cap, per_row * tb + 8 * 2**20)))

    target_2d = target.astype(jnp.int32).reshape(n, 1)
    kernel = functools.partial(_ls_ce_kernel, epsilon=float(epsilon), n_rows=n)

    tps = tiles_per_split
    out = pl.pallas_call(
        kernel,
        out_shape=jax.ShapeDtypeStruct((splits, 1), jnp.float32),
        grid_spec=pltpu.PrefetchScalarGridSpec(
            num_scalar_prefetch=0,
            grid=(splits, tiles_per_split),
            in_specs=[
                pl.BlockSpec((tb, c), lambda s, i: (s * tps + i, 0)),  # preds
                pl.BlockSpec((tb, 1), lambda s, i: (s * tps + i, 0)),  # target
            ],
            out_specs=pl.BlockSpec((1, 1), lambda s, i: (s, 0)),
            scratch_shapes=[pltpu.VMEM((1, 1), jnp.float32)],
        ),
        compiler_params=pltpu.CompilerParams(
            dimension_semantics=("parallel", "arbitrary"),
            vmem_limit_bytes=vmem_limit,
        ),
    )(preds, target_2d)

    return jnp.sum(out) * (1.0 / n)


def _reference(preds, target, epsilon=0.1):
    logp = jax.nn.log_softmax(preds.astype(jnp.float32), axis=-1)
    c = preds.shape[-1]
    loss = jnp.mean(-jnp.sum(logp, axis=-1))
    nll = jnp.mean(-jnp.take_along_axis(logp, target[:, None], axis=-1)[:, 0])
    return epsilon * (loss / c) + (1 - epsilon) * nll


if __name__ == "__main__":
    key = jax.random.PRNGKey(0)
    kp, kt, kp2, kt2, kp4, kt4 = jax.random.split(key, 6)

    # Case 1: small f32, single tile.
    batch, num_classes = 8, 128
    preds = jax.random.normal(kp, (batch, num_classes), dtype=jnp.float32)
    target = jax.random.randint(kt, (batch,), 0, num_classes, dtype=jnp.int32)
    out = jax.block_until_ready(label_smoothing_cross_entropy(preds, target, 0.1))
    ref = _reference(preds, target, 0.1)
    assert jnp.allclose(out, ref, atol=1e-5, rtol=1e-5), (out, ref)

    # Case 2: multi-tile grid with a partial last tile (masking path).
    batch2, num_classes2 = 20, 256
    preds2 = jax.random.normal(kp2, (batch2, num_classes2), dtype=jnp.float32)
    target2 = jax.random.randint(kt2, (batch2,), 0, num_classes2, dtype=jnp.int32)
    out2 = jax.block_until_ready(
        label_smoothing_cross_entropy(preds2, target2, 0.1, block_rows=8))
    ref2 = _reference(preds2, target2, 0.1)
    assert jnp.allclose(out2, ref2, atol=1e-5, rtol=1e-5), (out2, ref2)

    # Case 3: bf16 input stays bf16 across the pallas_call (native-dtype compute
    # for max/select, MXU lane reductions, f32 only for the exp path).
    preds3 = preds.astype(jnp.bfloat16)
    out3 = jax.block_until_ready(label_smoothing_cross_entropy(preds3, target, 0.1))
    ref3 = _reference(preds3, target, 0.1)
    assert jnp.allclose(out3, ref3, atol=1e-4, rtol=1e-4), (out3, ref3)

    # Case 4: exercises the 2-way "parallel" split (per-split partial sums).
    batch4, num_classes4 = 512, 128
    preds4 = jax.random.normal(kp4, (batch4, num_classes4), dtype=jnp.float32)
    target4 = jax.random.randint(kt4, (batch4,), 0, num_classes4, dtype=jnp.int32)
    out4 = jax.block_until_ready(
        label_smoothing_cross_entropy(preds4, target4, 0.1, block_rows=128))
    ref4 = _reference(preds4, target4, 0.1)
    assert jnp.allclose(out4, ref4, atol=1e-5, rtol=1e-5), (out4, ref4)

    print("KERNEL_OK")
</pallas_src>

<mosaic_0001>
module attributes {stable_mosaic.version = 11 : i64} {
  func.func @_ls_ce_kernel(%arg0: i32, %arg1: i32, %arg2: memref<8x128xf32, #tpu.memory_space<vmem>>, %arg3: memref<8x1xi32, #tpu.memory_space<vmem>>, %arg4: memref<1x1xf32, #tpu.memory_space<vmem>>, %arg5: memref<1x1xf32, #tpu.memory_space<vmem>>) attributes {dimension_semantics = [#tpu.dimension_semantics<parallel>, #tpu.dimension_semantics<arbitrary>], iteration_bounds = array<i64: 1, 1>, scalar_prefetch = 0 : i64, scratch_operands = 1 : i64, tpu.core_type = #tpu.core_type<tc>, window_params = [{transform_indices = @transform_0, window_bounds = array<i64: 8, 128>}, {transform_indices = @transform_1, window_bounds = array<i64: 8, 1>}, {transform_indices = @transform_2, window_bounds = array<i64: 1, 1>}]} {
    %c0_i32 = arith.constant 0 : i32
    %0 = arith.cmpi eq, %arg1, %c0_i32 : i32
    %1 = arith.extui %0 : i1 to i32
    %c0_i32_0 = arith.constant 0 : i32
    %2 = arith.cmpi ne, %1, %c0_i32_0 : i32
    scf.if %2 {
      %cst_20 = arith.constant 0.000000e+00 : f32
      %53 = vector.broadcast %cst_20 : f32 to vector<1x1xf32>
      %c0_21 = arith.constant 0 : index
      %c0_22 = arith.constant 0 : index
      %54 = vector.load %arg5[%c0_21, %c0_22] : memref<1x1xf32, #tpu.memory_space<vmem>>, vector<1x1xf32>
      tpu.vector_store %arg5[%c0_21, %c0_22], %53 {strides = array<i32>} : memref<1x1xf32, #tpu.memory_space<vmem>>, vector<1x1xf32>,
    } else {
    }
    %c0 = arith.constant 0 : index
    %c0_1 = arith.constant 0 : index
    %3 = vector.load %arg2[%c0, %c0_1] : memref<8x128xf32, #tpu.memory_space<vmem>>, vector<8x128xf32>
    %cst = arith.constant dense<0xFF800000> : vector<8xf32>
    %4 = vector.multi_reduction <maximumf>, %3, %cst [1] : vector<8x128xf32> to vector<8xf32>
    %5 = vector.shape_cast %4 : vector<8xf32> to vector<8x1xf32>
    %6 = vector.broadcast %5 : vector<8x1xf32> to vector<8x128xf32>
    %7 = arith.subf %3, %6 : vector<8x128xf32>
    %8 = math.exp %7 : vector<8x128xf32>
    %cst_2 = arith.constant dense<0.000000e+00> : vector<8xf32>
    %9 = vector.multi_reduction <add>, %8, %cst_2 [1] : vector<8x128xf32> to vector<8xf32>
    %10 = vector.shape_cast %9 : vector<8xf32> to vector<8x1xf32>
    %11 = math.log %10 : vector<8x1xf32>
    %12 = arith.addf %5, %11 : vector<8x1xf32>
    %c0_3 = arith.constant 0 : index
    %c0_4 = arith.constant 0 : index
    %13 = vector.load %arg3[%c0_3, %c0_4] : memref<8x1xi32, #tpu.memory_space<vmem>>, vector<8x1xi32>
    %14 = tpu.iota {dimensions = array<i32: 1>} : vector<8x128xi32>
    %15 = vector.broadcast %13 : vector<8x1xi32> to vector<8x128xi32>
    %16 = arith.cmpi eq, %14, %15 : vector<8x128xi32>
    %cst_5 = arith.constant 0.000000e+00 : f32
    %17 = vector.broadcast %cst_5 : f32 to vector<8x128xf32>
    %18 = arith.select %16, %3, %17 : vector<8x128xi1>, vector<8x128xf32>
    %cst_6 = arith.constant dense<0.000000e+00> : vector<8xf32>
    %19 = vector.multi_reduction <add>, %3, %cst_6 [1] : vector<8x128xf32> to vector<8xf32>
    %20 = vector.shape_cast %19 : vector<8xf32> to vector<8x1xf32>
    %cst_7 = arith.constant dense<0.000000e+00> : vector<8xf32>
    %21 = vector.multi_reduction <add>, %18, %cst_7 [1] : vector<8x128xf32> to vector<8xf32>
    %22 = vector.shape_cast %21 : vector<8xf32> to vector<8x1xf32>
    %cst_8 = arith.constant 1.280000e+02 : f32
    %23 = vector.broadcast %cst_8 : f32 to vector<8x1xf32>
    %24 = arith.mulf %23, %12 : vector<8x1xf32>
    %25 = arith.subf %24, %20 : vector<8x1xf32>
    %26 = arith.subf %12, %22 : vector<8x1xf32>
    %cst_9 = arith.constant 7.812500e-04 : f32
    %27 = vector.broadcast %cst_9 : f32 to vector<8x1xf32>
    %28 = arith.mulf %27, %25 : vector<8x1xf32>
    %cst_10 = arith.constant 0.899999976 : f32
    %29 = vector.broadcast %cst_10 : f32 to vector<8x1xf32>
    %30 = arith.mulf %29, %26 : vector<8x1xf32>
    %31 = arith.addf %28, %30 : vector<8x1xf32>
    %c1_i32 = arith.constant 1 : i32
    %32 = arith.muli %arg0, %c1_i32 : i32
    %33 = arith.addi %32, %arg1 : i32
    %c8_i32 = arith.constant 8 : i32
    %34 = arith.muli %33, %c8_i32 : i32
    %35 = tpu.iota {dimensions = array<i32: 0>} : vector<8x1xi32>
    %36 = vector.broadcast %34 : i32 to vector<8x1xi32>
    %37 = arith.addi %36, %35 : vector<8x1xi32>
    %c8_i32_11 = arith.constant 8 : i32
    %38 = vector.broadcast %c8_i32_11 : i32 to vector<8x1xi32>
    %39 = arith.cmpi slt, %37, %38 : vector<8x1xi32>
    %cst_12 = arith.constant 0.000000e+00 : f32
    %40 = vector.broadcast %cst_12 : f32 to vector<8x1xf32>
    %41 = arith.select %39, %31, %40 : vector<8x1xi1>, vector<8x1xf32>
    %c0_13 = arith.constant 0 : index
    %c0_14 = arith.constant 0 : index
    %42 = vector.load %arg5[%c0_13, %c0_14] : memref<1x1xf32, #tpu.memory_space<vmem>>, vector<1x1xf32>
    %43 = vector.shape_cast %41 : vector<8x1xf32> to vector<1x8x1xf32>
    %cst_15 = arith.constant dense<0.000000e+00> : vector<1xf32>
    %44 = vector.multi_reduction <add>, %43, %cst_15 [1, 2] : vector<1x8x1xf32> to vector<1xf32>
    %45 = vector.shape_cast %44 : vector<1xf32> to vector<1x1x1xf32>
    %46 = vector.extract %45[0, 0, 0] : f32 from vector<1x1x1xf32>
    %47 = vector.broadcast %46 : f32 to vector<1x1xf32>
    %48 = arith.addf %42, %47 : vector<1x1xf32>
    %c0_16 = arith.constant 0 : index
    %c0_17 = arith.constant 0 : index
    %49 = vector.load %arg5[%c0_16, %c0_17] : memref<1x1xf32, #tpu.memory_space<vmem>>, vector<1x1xf32>
    tpu.vector_store %arg5[%c0_16, %c0_17], %48 {strides = array<i32>} : memref<1x1xf32, #tpu.memory_space<vmem>>, vector<1x1xf32>,
    %c0_i32_18 = arith.constant 0 : i32
    %50 = arith.cmpi eq, %arg1, %c0_i32_18 : i32
    %51 = arith.extui %50 : i1 to i32
    %c0_i32_19 = arith.constant 0 : i32
    %52 = arith.cmpi ne, %51, %c0_i32_19 : i32
    scf.if %52 {
      %c0_20 = arith.constant 0 : index
      %c0_21 = arith.constant 0 : index
      %53 = vector.load %arg5[%c0_20, %c0_21] : memref<1x1xf32, #tpu.memory_space<vmem>>, vector<1x1xf32>
      %c0_22 = arith.constant 0 : index
      %c0_23 = arith.constant 0 : index
      %54 = vector.load %arg4[%c0_22, %c0_23] : memref<1x1xf32, #tpu.memory_space<vmem>>, vector<1x1xf32>
      tpu.vector_store %arg4[%c0_22, %c0_23], %53 {strides = array<i32>} : memref<1x1xf32, #tpu.memory_space<vmem>>, vector<1x1xf32>,
    } else {
    }
    return
  }
  func.func @transform_0(%arg0: i32, %arg1: i32) -> (i32, i32) {
    %c1_i32 = arith.constant 1 : i32
    %0 = arith.muli %arg0, %c1_i32 : i32
    %1 = arith.addi %0, %arg1 : i32
    %c0_i32 = arith.constant 0 : i32
    %c0_i32_0 = arith.constant 0 : i32
    return %1, %c0_i32 : i32, i32
  }
  func.func @transform_1(%arg0: i32, %arg1: i32) -> (i32, i32) {
    %c1_i32 = arith.constant 1 : i32
    %0 = arith.muli %arg0, %c1_i32 : i32
    %1 = arith.addi %0, %arg1 : i32
    %c0_i32 = arith.constant 0 : i32
    %c0_i32_0 = arith.constant 0 : i32
    return %1, %c0_i32 : i32, i32
  }
  func.func @transform_2(%arg0: i32, %arg1: i32) -> (i32, i32) {
    %c0_i32 = arith.constant 0 : i32
    %c0_i32_0 = arith.constant 0 : i32
    return %arg0, %c0_i32 : i32, i32
  }
}

</mosaic_0001>

<llo_original>
// kernel: tpu_custom_call.1
$region0: #{tpu_custom_call.1}
  #allocation0 [shape = 'u32[]', space=smem, size = 0x4, offset = 0x4, fixed_abs, tag = 'smem constant byte address 0x4 - core index']
  #allocation1 [shape = 'u32[144,128]{1,0:T(1,128)}', space=vmem, size = 0x12000, scoped, tag = 'internal scratch']
  #allocation2 [shape = 'f32[1,1]{1,0:T(1,128)}', space=vmem, size = 0x200, scoped, tag = 'scratch operand']
  %s0 = inlined_call_operand.vmem [shape: f32[8,128], index: 0, kind: input, shape index: {}]
  %s1 = inlined_call_operand.vmem [shape: s32[8,1], index: 1, kind: input, shape index: {}]
  %s2 = inlined_call_operand.hbm [shape: f32[1,1], index: 2, kind: output, shape index: {}]
  %s3 = sld [smem:[#allocation0]]
  $region26: #{tpu_custom_call.1} parent=0
    _
  %s5 = ssub.s32 1, %s3
  %s6 = scalar_select 0, %s5, %s3
  $region1: #{tpu_custom_call.1} parent=0
    #allocation3 [shape = 'u8[512]{0}', space=vmem, size = 0x400, scoped, tag = 'output window, operand 0, single buffered']
    #allocation4 [shape = 's32[1]{0}', space=sflag, size = 0x4, scoped, tag = 'scoped memory for tpu_custom_call.1']
    %7 = vsyncpa [#allocation4], 0
    // Predicated region
    $region2: #{tpu_custom_call.1} parent=1 // pred_check
      _
    $region3: #{tpu_custom_call.1} parent=1 // pred_check_branch
      %9 = sbr.rel (0) target = $region5
    $region4: #{tpu_custom_call.1} parent=1 // pred_region
      %s10 = sadd.s32 0, 0
      %p11 = scmp.lt.s32.totalorder %s10, 0
      %s12 = scalar_select %p11, %s10, 0
      %s13 = smul.addr %s12, 8
      %s14 = scalar_lea.vmem %s0, %s13
      %s15 = sadd.s32 0, 0
    $region5: #{tpu_custom_call.1} parent=1 // pred_fallthru
      _
    // Predicated region
    $region6: #{tpu_custom_call.1} parent=1 // pred_check
      _
    $region7: #{tpu_custom_call.1} parent=1 // pred_check_branch
      %17 = sbr.rel (0) target = $region9
    $region8: #{tpu_custom_call.1} parent=1 // pred_region
      %s18 = sadd.s32 0, 0
      %p19 = scmp.lt.s32.totalorder %s18, 0
      %s20 = scalar_select %p19, %s18, 0
      %s21 = smul.addr %s20, 8
      %s22 = scalar_lea.vmem %s1, %s21
      %s23 = sadd.s32 0, 0
    $region9: #{tpu_custom_call.1} parent=1 // pred_fallthru
      _
    %s24 = sadd.s32 0, 0
    %p25 = scmp.lt.s32.totalorder %s24, 0
    %s26 = scalar_select %p25, %s24, 0
    %s27 = smul.addr %s26, 8
    %s28 = scalar_lea.vmem %s0, %s27
    %s29 = sadd.s32 0, 0
    %p30 = scmp.lt.s32.totalorder %s29, 0
    %s31 = scalar_select %p30, %s29, 0
    %s32 = smul.addr %s31, 8
    %s33 = scalar_lea.vmem %s1, %s32
    %s34 = sadd.s32 0, 0
    %p35 = scmp.lt.s32.totalorder %s34, 0
    %s36 = scalar_select %p35, %s34, 0
    %s37 = smul.addr %s36, 8
    %s38 = scalar_lea.vmem %s0, %s37
    %s39 = sadd.s32 0, 0
    %s40 = sadd.s32 0, 0
    %p41 = scmp.lt.s32.totalorder %s40, 0
    %s42 = scalar_select %p41, %s40, 0
    %s43 = smul.addr %s42, 8
    %s44 = scalar_lea.vmem %s1, %s43
    %s45 = sadd.s32 0, 0
    %p46 = scmp.eq.s32.totalorder 0, 0
    // Predicated region
    $region10: #{tpu_custom_call.1} parent=1 // pred_check
      %p47 = pneg %p46
    $region11: #{tpu_custom_call.1} parent=1 // pred_check_branch
      %49 = sbr.rel (%p47) target = $region13
    $region12: #{tpu_custom_call.1} parent=1 // pred_region
      %vm50 = vcmask 0
      %51 = vst.msk [vmem:[#allocation2] sm:$0x1] %vm50, 0.0
    $region13: #{tpu_custom_call.1} parent=1 // pred_fallthru
      _
    %v52 = vld [vmem:[%s38] sm:$0xff]
    %53 = vmax.xlane.f32.xlu0 %v52
    %v54 = vpop.xlane.xlu0 %53
    %v55 = vsub.f32 %v52, %v54
    %v56 = vmul.f32 %v55, 1.442695
    %v57 = vpow.pop %v56
    %58 = vadd.xlane.f32.xlu0 %v57
    %v59 = vpop.xlane.xlu0 %58
    %v60 = vlog2.pop %v59
    %v61 = vmul.f32 %v60, 0.6931472
    %v62 = vadd.f32 %v54, %v61
    %v63 = vld [vmem:[%s44] sm:$0xff]
    %v64 = vlaneseq
    %v65 = vand.u32 %v64, 127
    %66 = vset.pattern.permute.xlu0 0
    %67 = vperm.xlu0 %66, %v63
    %v68 = vpop.permute.xlu0 %67
    %vm69 = vcmp.eq.s32.totalorder %v65, %v68
    %v70 = vsel %vm69, %v52, 0.0
    %71 = vadd.xlane.f32.xlu0 %v52
    %v72 = vpop.xlane.xlu0 %71
    %73 = vadd.xlane.f32.xlu0 %v70
    %v74 = vpop.xlane.xlu0 %73
    %v75 = vmul.f32 %v62, 128.0
    %v76 = vsub.f32 %v75, %v72
    %v77 = vsub.f32 %v62, %v74
    %v78 = vmul.f32 %v76, 0.00078125
    %v79 = vmul.f32 %v77, 0.9
    %v80 = vadd.f32 %v78, %v79
    %s81 = sadd.s32 0, 0
    %s82 = smul.u32 %s81, 8
    %v83 = vlaneseq
    %v84 = vshrl.u32 %v83, 7
    %v85 = vstv %s82
    %v86 = vadd.s32 %v85, %v84
    %vm87 = vcmp.lt.s32.totalorder %v86, 8
    %v88 = vsel %vm87, %v80, 0.0
    %v89 = vld [vmem:[#allocation2] sm:$0x1]
    %vm90 = vcmask 7168
    %v91 = vsel %vm90, %v88, 0.0
    %92 = vadd.xlane.f32.xlu0 %v91
    %v93 = vpop.xlane.xlu0 %92
    %v94 = vrot.slane %v93, 4
    %v95 = vadd.f32 %v93, %v94
    %v96 = vrot.slane %v95, 2
    %v97 = vadd.f32 %v95, %v96
    %v98 = vrot.slane %v97, 1
    %v99 = vadd.f32 %v97, %v98
    %s100 = vtos %v99
    %v101 = vstv %s100
    %v102 = vadd.f32 %v89, %v101
    %vm103 = vcmask 0
    %104 = vst.msk [vmem:[#allocation2] sm:$0x1] %vm103, %v102
    // Predicated region
    $region14: #{tpu_custom_call.1} parent=1 // pred_check
      %p105 = pneg %p46
    $region15: #{tpu_custom_call.1} parent=1 // pred_check_branch
      %107 = sbr.rel (%p105) target = $region17
    $region16: #{tpu_custom_call.1} parent=1 // pred_region
      %v108 = vld [vmem:[#allocation2] sm:$0x1]
      %109 = vst.msk [vmem:[#allocation3] sm:$0x1] %vm103, %v108
    $region17: #{tpu_custom_call.1} parent=1 // pred_fallthru
      _
    // Predicated region
    $region18: #{tpu_custom_call.1} parent=1 // pred_check
      _
    $region19: #{tpu_custom_call.1} parent=1 // pred_check_branch
      %111 = sbr.rel (0) target = $region21
    $region20: #{tpu_custom_call.1} parent=1 // pred_region
      %s113 = ssub.s32 16, 16
      %114 = vsyncadd [#allocation4], %s113
      %s116 = sshll.u32 [#allocation3], 4
      %s117 = int_to_ptr.vmem [resolvable:$true] %s116
      %119 = dma.vmem_to_hbm [thread:$0]  %s117, 16, %s2, [#allocation4]
    $region21: #{tpu_custom_call.1} parent=1 // pred_fallthru
      _
    // Predicated region
    $region22: #{tpu_custom_call.1} parent=1 // pred_check
      _
    $region23: #{tpu_custom_call.1} parent=1 // pred_check_branch
      %121 = sbr.rel (0) target = $region25
    $region24: #{tpu_custom_call.1} parent=1 // pred_region
      %122 = dma.done [#allocation4], 16
    $region25: #{tpu_custom_call.1} parent=1 // pred_fallthru
      _
    %123 = vsyncpa [#allocation4], 1

</llo_original>
